<compile_context>
chip_gen: v5e
topology: v5e:2x2
jax: 0.10.0
libtpu: 0.0.40
codegen_flags: <defaults>
</compile_context>

<pallas_src>
import functools
import math

import jax
import jax.numpy as jnp
from jax.experimental import pallas as pl
from jax.experimental.pallas import tpu as pltpu


_ROW_TILE = 512                      # output-row tile (multiple of 8 and 128)
_NBR_TILE = 2048                     # neighbor (reduction) tile for A
_VMEM_LIMIT = 48 * 1024 * 1024       # scoped-VMEM budget (< 64 MiB physical on v7x)
_H_RESIDENT_BYTES = 8 * 1024 * 1024  # keep H' fully VMEM-resident below this size
_X_BLOCK_BYTES = 8 * 1024 * 1024     # cap on the (tile_m, f_pad) f32 X block


# ----------------------------------------------------------------------------
# helpers
# ----------------------------------------------------------------------------
def _round_up(v, m):
    return ((v + m - 1) // m) * m


def _plan_dim(dim, pref_tile):
    """Pad `dim` to a lane/sublane-legal size and pick a tile dividing it.

    Prefers big tiles but shrinks the tile rather than padding by more than
    half a tile (padding A is O(N^2) wasted HBM traffic).
    """
    padded = _round_up(dim, 128)
    if padded <= pref_tile:
        return padded, padded          # one full-extent tile (always layout-legal)
    tile = pref_tile
    while tile > 128 and _round_up(padded, tile) - padded > tile // 2:
        tile //= 2
    return _round_up(padded, tile), tile


def _pick_nbr_tile(n_pad, tile_m, pref):
    """Largest multiple of tile_m that divides n_pad and is <= pref."""
    t = tile_m
    while t * 2 <= min(pref, n_pad) and n_pad % (t * 2) == 0:
        t *= 2
    return t


def _pad2(a, shape):
    pads = [(0, t - s) for s, t in zip(a.shape, shape)]
    if all(p == 0 for _, p in pads):
        return a                        # skip the extra read+write when aligned
    return jnp.pad(a, pads)


# ----------------------------------------------------------------------------
# kernels
# ----------------------------------------------------------------------------
def _transform_kernel(x_ref, w_ref, dinv_ref, o_ref):
    """H' = D^{-1/2} (X @ W).  W is resident; one matmul per row tile."""
    h = jnp.dot(x_ref[...], w_ref[...], preferred_element_type=jnp.float32)
    o_ref[...] = (dinv_ref[...] * h).astype(o_ref.dtype)


def _aggregate_kernel(a_ref, h_ref, h_row_ref, dinv_row_ref, b_ref, o_ref, *,
                      h_resident, tile_k):
    """out = dinv_row * (A @ H' + H'_row) + b, K-tiled over the neighbor axis.

    A is the RAW (bf16) adjacency; the self-loop and symmetric normalization
    are recovered exactly in the finalize, so every grid step is pure DMA+MXU.
    """
    k = pl.program_id(1)

    @pl.when(k == 0)
    def _init():
        o_ref[...] = jnp.zeros_like(o_ref)

    if h_resident:
        start = pl.multiple_of(k * tile_k, tile_k)
        h_blk = h_ref[pl.ds(start, tile_k), :]
    else:
        h_blk = h_ref[...]

    o_ref[...] += jnp.dot(a_ref[...], h_blk, preferred_element_type=jnp.float32)

    @pl.when(k == pl.num_programs(1) - 1)
    def _finalize():
        acc = o_ref[...] + h_row_ref[...].astype(jnp.float32)   # + I term
        o_ref[...] = dinv_row_ref[...] * acc + b_ref[...]


# ----------------------------------------------------------------------------
# pallas_call wrappers
# ----------------------------------------------------------------------------
def _feature_transform(x_p, w_p, dinv_rows, *, tile_m):
    n_pad, f_pad = x_p.shape
    c_pad = w_p.shape[1]
    return pl.pallas_call(
        _transform_kernel,
        out_shape=jax.ShapeDtypeStruct((n_pad, c_pad), jnp.bfloat16),
        grid_spec=pltpu.PrefetchScalarGridSpec(
            num_scalar_prefetch=0,
            grid=(n_pad // tile_m,),
            in_specs=[
                pl.BlockSpec((tile_m, f_pad), lambda i: (i, 0)),   # X row tile
                pl.BlockSpec((f_pad, c_pad), lambda i: (0, 0)),    # W (resident)
                pl.BlockSpec((tile_m, 1), lambda i: (i, 0)),       # D^-1/2 rows
            ],
            out_specs=pl.BlockSpec((tile_m, c_pad), lambda i: (i, 0)),
        ),
        compiler_params=pltpu.CompilerParams(
            dimension_semantics=("parallel",),
            vmem_limit_bytes=_VMEM_LIMIT,
        ),
    )(x_p, w_p, dinv_rows)


def _aggregate(a_p, h, dinv_rows, b_p, *, tile_m, tile_k):
    n_pad = a_p.shape[0]
    c_pad = h.shape[1]
    h_resident = n_pad * c_pad * h.dtype.itemsize <= _H_RESIDENT_BYTES

    if h_resident:
        # one DMA of H' into VMEM, kept resident across the whole grid
        h_spec = pl.BlockSpec((n_pad, c_pad), lambda i, k: (0, 0))
    else:
        h_spec = pl.BlockSpec((tile_k, c_pad), lambda i, k: (k, 0))

    kernel = functools.partial(_aggregate_kernel,
                               h_resident=h_resident, tile_k=tile_k)
    return pl.pallas_call(
        kernel,
        out_shape=jax.ShapeDtypeStruct((n_pad, c_pad), jnp.float32),
        grid_spec=pltpu.PrefetchScalarGridSpec(
            num_scalar_prefetch=0,
            grid=(n_pad // tile_m, n_pad // tile_k),
            in_specs=[
                pl.BlockSpec((tile_m, tile_k), lambda i, k: (i, k)),   # raw A tile
                h_spec,                                                # H' (resident or k-tiled)
                pl.BlockSpec((tile_m, c_pad), lambda i, k: (i, 0)),    # H' row tile (self-loop)
                pl.BlockSpec((tile_m, 1), lambda i, k: (i, 0)),        # D^-1/2 rows
                pl.BlockSpec((1, c_pad), lambda i, k: (0, 0)),         # bias (resident)
            ],
            out_specs=pl.BlockSpec((tile_m, c_pad), lambda i, k: (i, 0)),
        ),
        compiler_params=pltpu.CompilerParams(
            dimension_semantics=("parallel", "arbitrary"),
            vmem_limit_bytes=_VMEM_LIMIT,
        ),
    )(a_p, h, h, dinv_rows, b_p)


# ----------------------------------------------------------------------------
# forward (mirrors StandGCN1.forward(x, adj))
# ----------------------------------------------------------------------------
@jax.jit
def gcn_forward(params, x, adj):
    w_t, b = params["w_t"], params["b"]
    x = x.astype(jnp.float32)
    adj_bf = adj.astype(jnp.bfloat16)          # 0/1 adjacency is exact in bf16
    n, f = x.shape
    c = w_t.shape[1]

    # tile / padding plan: lane-dense (multiples of 128) last dims everywhere
    n_pad, tile_m = _plan_dim(n, _ROW_TILE)
    f_pad = _round_up(f, 128)
    c_pad = _round_up(c, 128)
    tile_k = _pick_nbr_tile(n_pad, tile_m, _NBR_TILE)

    # cap the transform's row tile so the (tile, f_pad) f32 X block stays small
    tile_m_t = tile_m
    while tile_m_t > 128 and tile_m_t * f_pad * 4 > _X_BLOCK_BYTES:
        tile_m_t //= 2

    # symmetric GCN normalization, D = rowsum(A + I); degrees read A in bf16,
    # accumulated in f32.  Padded nodes get dinv = 0 (zero padding below).
    deg = jnp.sum(adj_bf, axis=-1, dtype=jnp.float32) + 1.0
    dinv = jnp.where(deg > 0, jax.lax.rsqrt(deg), 0.0)

    x_p = _pad2(x, (n_pad, f_pad))
    w_p = _pad2(w_t, (f_pad, c_pad))
    b_p = _pad2(b, (1, c_pad))
    a_p = _pad2(adj_bf, (n_pad, n_pad))        # no-op when already tile-aligned
    dinv_rows = _pad2(dinv[:, None], (n_pad, 1))

    h = _feature_transform(x_p, w_p, dinv_rows, tile_m=tile_m_t)   # (n_pad, c_pad) bf16
    out = _aggregate(a_p, h, dinv_rows, b_p, tile_m=tile_m, tile_k=tile_k)

    # padded rows have dinv_row == 0 and padded class columns carry zero
    # weight/bias, so slicing (no softmax in this module) is exact.
    return out[:n, :c]


# ----------------------------------------------------------------------------
# parameter init (PyTorch stores weight (out,in); we keep the transpose (in,out))
# ----------------------------------------------------------------------------
def init_gcn_params(key, nfeat, nclass):
    kw, kb = jax.random.split(key)
    bound = 1.0 / math.sqrt(nfeat)
    w_t = jax.random.uniform(kw, (nfeat, nclass), jnp.float32, -bound, bound)
    b = jax.random.uniform(kb, (1, nclass), jnp.float32, -bound, bound)
    return {"w_t": w_t, "b": b}


# ----------------------------------------------------------------------------
# pure-JAX reference
# ----------------------------------------------------------------------------
def gcn_forward_ref(params, x, adj):
    n = x.shape[0]
    a_hat = adj + jnp.eye(n, dtype=adj.dtype)
    deg = jnp.sum(a_hat, axis=-1)
    dinv = jnp.where(deg > 0, jax.lax.rsqrt(deg), 0.0)
    a_norm = a_hat * dinv[:, None] * dinv[None, :]
    h = jnp.dot(x, params["w_t"], precision=jax.lax.Precision.HIGHEST)
    return jnp.dot(a_norm, h, precision=jax.lax.Precision.HIGHEST) + params["b"]


if __name__ == "__main__":
    # StandGCN1(nfeat, nhid, nclass, dropout): nhid / dropout / nlayer are
    # accepted but unused by the module (it builds a single GCNConv(nfeat, nclass)).
    nfeat, nhid, nclass, dropout = 48, 64, 7, 0.5
    n_nodes = 20

    key = jax.random.PRNGKey(0)
    kx, ka, kp = jax.random.split(key, 3)

    x = jax.random.normal(kx, (n_nodes, nfeat), jnp.float32)
    # deterministic undirected graph as a dense 0/1 adjacency (no self-loops)
    upper = (jax.random.uniform(ka, (n_nodes, n_nodes)) < 0.2).astype(jnp.float32)
    upper = jnp.triu(upper, k=1)
    adj = upper + upper.T

    params = init_gcn_params(kp, nfeat, nclass)

    out = gcn_forward(params, x, adj)
    out = jax.block_until_ready(out)

    ref = gcn_forward_ref(params, x, adj)
    assert out.shape == (n_nodes, nclass)
    max_err = float(jnp.max(jnp.abs(out - ref)))
    assert jnp.allclose(out, ref, atol=5e-3, rtol=5e-3), (
        f"mismatch vs reference (max abs err {max_err})")
    print("KERNEL_OK")
</pallas_src>

<mosaic_0001>
module attributes {stable_mosaic.version = 11 : i64} {
  func.func @_aggregate_kernel(%arg0: i32, %arg1: i32, %arg2: memref<128x128xbf16, #tpu.memory_space<vmem>>, %arg3: memref<128x128xbf16, #tpu.memory_space<vmem>>, %arg4: memref<128x128xbf16, #tpu.memory_space<vmem>>, %arg5: memref<128x1xf32, #tpu.memory_space<vmem>>, %arg6: memref<1x128xf32, #tpu.memory_space<vmem>>, %arg7: memref<128x128xf32, #tpu.memory_space<vmem>>) attributes {dimension_semantics = [#tpu.dimension_semantics<parallel>, #tpu.dimension_semantics<arbitrary>], iteration_bounds = array<i64: 1, 1>, scalar_prefetch = 0 : i64, scratch_operands = 0 : i64, tpu.core_type = #tpu.core_type<tc>, window_params = [{transform_indices = @transform_0, window_bounds = array<i64: 128, 128>}, {pipeline_mode = #tpu.pipeline_mode<synchronous>, transform_indices = @transform_1, window_bounds = array<i64: 128, 128>}, {transform_indices = @transform_2, window_bounds = array<i64: 128, 128>}, {transform_indices = @transform_3, window_bounds = array<i64: 128, 1>}, {pipeline_mode = #tpu.pipeline_mode<synchronous>, transform_indices = @transform_4, window_bounds = array<i64: 1, 128>}, {transform_indices = @transform_5, window_bounds = array<i64: 128, 128>}]} {
    %c0_i32 = arith.constant 0 : i32
    %0 = arith.cmpi eq, %arg1, %c0_i32 : i32
    %1 = arith.extui %0 : i1 to i32
    %c0_i32_0 = arith.constant 0 : i32
    %2 = arith.cmpi ne, %1, %c0_i32_0 : i32
    scf.if %2 {
      %cst_9 = arith.constant 0.000000e+00 : f32
      %15 = vector.broadcast %cst_9 : f32 to vector<128x128xf32>
      %c0_10 = arith.constant 0 : index
      %c0_11 = arith.constant 0 : index
      %16 = vector.load %arg7[%c0_10, %c0_11] : memref<128x128xf32, #tpu.memory_space<vmem>>, vector<128x128xf32>
      tpu.vector_store %arg7[%c0_10, %c0_11], %15 {strides = array<i32>} : memref<128x128xf32, #tpu.memory_space<vmem>>, vector<128x128xf32>,
    } else {
    }
    %c128_i32 = arith.constant 128 : i32
    %3 = arith.muli %arg1, %c128_i32 : i32
    %4 = tpu.assume_multiple %3, 128 : i32
    %5 = arith.index_cast %4 : i32 to index
    %c0 = arith.constant 0 : index
    %6 = vector.load %arg3[%5, %c0] : memref<128x128xbf16, #tpu.memory_space<vmem>>, vector<128x128xbf16>
    %c0_1 = arith.constant 0 : index
    %c0_2 = arith.constant 0 : index
    %7 = vector.load %arg7[%c0_1, %c0_2] : memref<128x128xf32, #tpu.memory_space<vmem>>, vector<128x128xf32>
    %c0_3 = arith.constant 0 : index
    %c0_4 = arith.constant 0 : index
    %8 = vector.load %arg2[%c0_3, %c0_4] : memref<128x128xbf16, #tpu.memory_space<vmem>>, vector<128x128xbf16>
    %cst = arith.constant dense<0.000000e+00> : vector<128x128xf32>
    %9 = tpu.matmul %8, %6, %cst {dimension_numbers = #tpu.dot_dimension_numbers<[1], [0], [0], [1], [0, 0, 1, 1], [], []>} : vector<128x128xbf16>, vector<128x128xbf16>, vector<128x128xf32> -> vector<128x128xf32>
    %10 = arith.addf %7, %9 : vector<128x128xf32>
    %c0_5 = arith.constant 0 : index
    %c0_6 = arith.constant 0 : index
    %11 = vector.load %arg7[%c0_5, %c0_6] : memref<128x128xf32, #tpu.memory_space<vmem>>, vector<128x128xf32>
    tpu.vector_store %arg7[%c0_5, %c0_6], %10 {strides = array<i32>} : memref<128x128xf32, #tpu.memory_space<vmem>>, vector<128x128xf32>,
    %c0_i32_7 = arith.constant 0 : i32
    %12 = arith.cmpi eq, %arg1, %c0_i32_7 : i32
    %13 = arith.extui %12 : i1 to i32
    %c0_i32_8 = arith.constant 0 : i32
    %14 = arith.cmpi ne, %13, %c0_i32_8 : i32
    scf.if %14 {
      %c0_9 = arith.constant 0 : index
      %c0_10 = arith.constant 0 : index
      %15 = vector.load %arg7[%c0_9, %c0_10] : memref<128x128xf32, #tpu.memory_space<vmem>>, vector<128x128xf32>
      %c0_11 = arith.constant 0 : index
      %c0_12 = arith.constant 0 : index
      %16 = vector.load %arg4[%c0_11, %c0_12] : memref<128x128xbf16, #tpu.memory_space<vmem>>, vector<128x128xbf16>
      %17 = arith.extf %16 : vector<128x128xbf16> to vector<128x128xf32>
      %18 = arith.addf %15, %17 : vector<128x128xf32>
      %c0_13 = arith.constant 0 : index
      %c0_14 = arith.constant 0 : index
      %19 = vector.load %arg5[%c0_13, %c0_14] : memref<128x1xf32, #tpu.memory_space<vmem>>, vector<128x1xf32>
      %20 = vector.broadcast %19 : vector<128x1xf32> to vector<128x128xf32>
      %21 = arith.mulf %20, %18 : vector<128x128xf32>
      %c0_15 = arith.constant 0 : index
      %c0_16 = arith.constant 0 : index
      %22 = vector.load %arg6[%c0_15, %c0_16] : memref<1x128xf32, #tpu.memory_space<vmem>>, vector<1x128xf32>
      %23 = vector.broadcast %22 : vector<1x128xf32> to vector<128x128xf32>
      %24 = arith.addf %21, %23 : vector<128x128xf32>
      %c0_17 = arith.constant 0 : index
      %c0_18 = arith.constant 0 : index
      %25 = vector.load %arg7[%c0_17, %c0_18] : memref<128x128xf32, #tpu.memory_space<vmem>>, vector<128x128xf32>
      tpu.vector_store %arg7[%c0_17, %c0_18], %24 {strides = array<i32>} : memref<128x128xf32, #tpu.memory_space<vmem>>, vector<128x128xf32>,
    } else {
    }
    return
  }
  func.func @transform_0(%arg0: i32, %arg1: i32) -> (i32, i32) {
    %c0_i32 = arith.constant 0 : i32
    return %arg0, %arg1 : i32, i32
  }
  func.func @transform_1(%arg0: i32, %arg1: i32) -> (i32, i32) {
    %c0_i32 = arith.constant 0 : i32
    %c0_i32_0 = arith.constant 0 : i32
    %c0_i32_1 = arith.constant 0 : i32
    return %c0_i32, %c0_i32_0 : i32, i32
  }
  func.func @transform_2(%arg0: i32, %arg1: i32) -> (i32, i32) {
    %c0_i32 = arith.constant 0 : i32
    %c0_i32_0 = arith.constant 0 : i32
    return %arg0, %c0_i32 : i32, i32
  }
  func.func @transform_3(%arg0: i32, %arg1: i32) -> (i32, i32) {
    %c0_i32 = arith.constant 0 : i32
    %c0_i32_0 = arith.constant 0 : i32
    return %arg0, %c0_i32 : i32, i32
  }
  func.func @transform_4(%arg0: i32, %arg1: i32) -> (i32, i32) {
    %c0_i32 = arith.constant 0 : i32
    %c0_i32_0 = arith.constant 0 : i32
    %c0_i32_1 = arith.constant 0 : i32
    return %c0_i32, %c0_i32_0 : i32, i32
  }
  func.func @transform_5(%arg0: i32, %arg1: i32) -> (i32, i32) {
    %c0_i32 = arith.constant 0 : i32
    %c0_i32_0 = arith.constant 0 : i32
    return %arg0, %c0_i32 : i32, i32
  }
}

module attributes {stable_mosaic.version = 11 : i64} {
  func.func @_transform_kernel(%arg0: i32, %arg1: memref<128x128xf32, #tpu.memory_space<vmem>>, %arg2: memref<128x128xf32, #tpu.memory_space<vmem>>, %arg3: memref<128x1xf32, #tpu.memory_space<vmem>>, %arg4: memref<128x128xbf16, #tpu.memory_space<vmem>>) attributes {dimension_semantics = [#tpu.dimension_semantics<parallel>], iteration_bounds = array<i64: 1>, scalar_prefetch = 0 : i64, scratch_operands = 0 : i64, tpu.core_type = #tpu.core_type<tc>, window_params = [{transform_indices = @transform_0, window_bounds = array<i64: 128, 128>}, {pipeline_mode = #tpu.pipeline_mode<synchronous>, transform_indices = @transform_1, window_bounds = array<i64: 128, 128>}, {transform_indices = @transform_2, window_bounds = array<i64: 128, 1>}, {transform_indices = @transform_3, window_bounds = array<i64: 128, 128>}]} {
    %c0 = arith.constant 0 : index
    %c0_0 = arith.constant 0 : index
    %0 = vector.load %arg1[%c0, %c0_0] : memref<128x128xf32, #tpu.memory_space<vmem>>, vector<128x128xf32>
    %c0_1 = arith.constant 0 : index
    %c0_2 = arith.constant 0 : index
    %1 = vector.load %arg2[%c0_1, %c0_2] : memref<128x128xf32, #tpu.memory_space<vmem>>, vector<128x128xf32>
    %cst = arith.constant dense<0.000000e+00> : vector<128x128xf32>
    %2 = tpu.matmul %0, %1, %cst {dimension_numbers = #tpu.dot_dimension_numbers<[1], [0], [0], [1], [0, 0, 1, 1], [], []>} : vector<128x128xf32>, vector<128x128xf32>, vector<128x128xf32> -> vector<128x128xf32>
    %c0_3 = arith.constant 0 : index
    %c0_4 = arith.constant 0 : index
    %3 = vector.load %arg3[%c0_3, %c0_4] : memref<128x1xf32, #tpu.memory_space<vmem>>, vector<128x1xf32>
    %4 = vector.broadcast %3 : vector<128x1xf32> to vector<128x128xf32>
    %5 = arith.mulf %4, %2 : vector<128x128xf32>
    %6 = arith.truncf %5 : vector<128x128xf32> to vector<128x128xbf16>
    %c0_5 = arith.constant 0 : index
    %c0_6 = arith.constant 0 : index
    %7 = vector.load %arg4[%c0_5, %c0_6] : memref<128x128xbf16, #tpu.memory_space<vmem>>, vector<128x128xbf16>
    tpu.vector_store %arg4[%c0_5, %c0_6], %6 {strides = array<i32>} : memref<128x128xbf16, #tpu.memory_space<vmem>>, vector<128x128xbf16>,
    return
  }
  func.func @transform_0(%arg0: i32) -> (i32, i32) {
    %c0_i32 = arith.constant 0 : i32
    %c0_i32_0 = arith.constant 0 : i32
    return %arg0, %c0_i32 : i32, i32
  }
  func.func @transform_1(%arg0: i32) -> (i32, i32) {
    %c0_i32 = arith.constant 0 : i32
    %c0_i32_0 = arith.constant 0 : i32
    %c0_i32_1 = arith.constant 0 : i32
    return %c0_i32, %c0_i32_0 : i32, i32
  }
  func.func @transform_2(%arg0: i32) -> (i32, i32) {
    %c0_i32 = arith.constant 0 : i32
    %c0_i32_0 = arith.constant 0 : i32
    return %arg0, %c0_i32 : i32, i32
  }
  func.func @transform_3(%arg0: i32) -> (i32, i32) {
    %c0_i32 = arith.constant 0 : i32
    %c0_i32_0 = arith.constant 0 : i32
    return %arg0, %c0_i32 : i32, i32
  }
}

</mosaic_0001>

<llo_original>
// kernel: gcn_forward.2
$region0: #{gcn_forward.2}
  #allocation0 [shape = 'u32[]', space=smem, size = 0x4, offset = 0x4, fixed_abs, tag = 'smem constant byte address 0x4 - core index']
  #allocation1 [shape = 'u32[72,128]{1,0:T(1,128)}', space=vmem, size = 0x9000, scoped, tag = 'internal scratch']
  %s0 = inlined_call_operand.vmem [shape: f32[128,128], index: 0, kind: input, shape index: {}]
  %s1 = inlined_call_operand.vmem [shape: f32[128,128], index: 1, kind: input, shape index: {}]
  %s2 = inlined_call_operand.vmem [shape: f32[128,1], index: 2, kind: input, shape index: {}]
  %s3 = inlined_call_operand.vmem [shape: bf16[128,128], index: 3, kind: output, shape index: {}]
  %s4 = sld [smem:[#allocation0]]
  $region22: #{gcn_forward.2} parent=0
    _
  %s6 = ssub.s32 1, %s4
  %s7 = scalar_select 0, %s6, %s4
  // Predicated region
  $region2: #{gcn_forward.2} parent=0 // pred_check
    _
  $region3: #{gcn_forward.2} parent=0 // pred_check_branch
    %9 = sbr.rel (0) target = $region5
  $region4: #{gcn_forward.2} parent=0 // pred_region
    _
  $region5: #{gcn_forward.2} parent=0 // pred_fallthru
    _
  // Predicated region
  $region6: #{gcn_forward.2} parent=0 // pred_check
    _
  $region7: #{gcn_forward.2} parent=0 // pred_check_branch
    %11 = sbr.rel (0) target = $region9
  $region8: #{gcn_forward.2} parent=0 // pred_region
    _
  $region9: #{gcn_forward.2} parent=0 // pred_fallthru
    _
  // Predicated region
  $region10: #{gcn_forward.2} parent=0 // pred_check
    _
  $region11: #{gcn_forward.2} parent=0 // pred_check_branch
    %13 = sbr.rel (0) target = $region13
  $region12: #{gcn_forward.2} parent=0 // pred_region
    _
  $region13: #{gcn_forward.2} parent=0 // pred_fallthru
    _
  %v14 = vld [vmem:[%s0] sm:$0xff]
  %v15 = vld [vmem:[%s0 + $0x8] sm:$0xff]
  %v16 = vld [vmem:[%s0 + $0x10] sm:$0xff]
  %v17 = vld [vmem:[%s0 + $0x18] sm:$0xff]
  %v18 = vld [vmem:[%s0 + $0x20] sm:$0xff]
  %v19 = vld [vmem:[%s0 + $0x28] sm:$0xff]
  %v20 = vld [vmem:[%s0 + $0x30] sm:$0xff]
  %v21 = vld [vmem:[%s0 + $0x38] sm:$0xff]
  %v22 = vld [vmem:[%s0 + $0x40] sm:$0xff]
  %v23 = vld [vmem:[%s0 + $0x48] sm:$0xff]
  %v24 = vld [vmem:[%s0 + $0x50] sm:$0xff]
  %v25 = vld [vmem:[%s0 + $0x58] sm:$0xff]
  %v26 = vld [vmem:[%s0 + $0x60] sm:$0xff]
  %v27 = vld [vmem:[%s0 + $0x68] sm:$0xff]
  %v28 = vld [vmem:[%s0 + $0x70] sm:$0xff]
  %v29 = vld [vmem:[%s0 + $0x78] sm:$0xff]
  %v30 = vld [vmem:[%s1] sm:$0xff]
  %v31 = vld [vmem:[%s1 + $0x8] sm:$0xff]
  %v32 = vld [vmem:[%s1 + $0x10] sm:$0xff]
  %v33 = vld [vmem:[%s1 + $0x18] sm:$0xff]
  %v34 = vld [vmem:[%s1 + $0x20] sm:$0xff]
  %v35 = vld [vmem:[%s1 + $0x28] sm:$0xff]
  %v36 = vld [vmem:[%s1 + $0x30] sm:$0xff]
  %v37 = vld [vmem:[%s1 + $0x38] sm:$0xff]
  %v38 = vld [vmem:[%s1 + $0x40] sm:$0xff]
  %v39 = vld [vmem:[%s1 + $0x48] sm:$0xff]
  %v40 = vld [vmem:[%s1 + $0x50] sm:$0xff]
  %v41 = vld [vmem:[%s1 + $0x58] sm:$0xff]
  %v42 = vld [vmem:[%s1 + $0x60] sm:$0xff]
  %v43 = vld [vmem:[%s1 + $0x68] sm:$0xff]
  %v44 = vld [vmem:[%s1 + $0x70] sm:$0xff]
  %v45 = vld [vmem:[%s1 + $0x78] sm:$0xff]
  %46 = vmatpush.msra.mxu0 %v45
  %47 = vmatpush.msra.mxu0 %v44
  %48 = vmatpush.msra.mxu0 %v43
  %49 = vmatpush.msra.mxu0 %v42
  %50 = vmatpush.msra.mxu0 %v41
  %51 = vmatpush.msra.mxu0 %v40
  %52 = vmatpush.msra.mxu0 %v39
  %53 = vmatpush.msra.mxu0 %v38
  %54 = vmatpush.msra.mxu0 %v37
  %55 = vmatpush.msra.mxu0 %v36
  %56 = vmatpush.msra.mxu0 %v35
  %57 = vmatpush.msra.mxu0 %v34
  %58 = vmatpush.msra.mxu0 %v33
  %59 = vmatpush.msra.mxu0 %v32
  %60 = vmatpush.msra.mxu0 %v31
  %61 = vmatpush.msra.mxu0 %v30
  %62 = vmatmul.f32.gmra.mxu0 %v14
  %v63 = vpop.f32.mrf.mxu0
  %v64 = vadd.f32 0.0, %v63
  %65 = vmatmul.f32.gmra.mxu0 %v15
  %v66 = vpop.f32.mrf.mxu0
  %v67 = vadd.f32 0.0, %v66
  %68 = vmatmul.f32.gmra.mxu0 %v16
  %v69 = vpop.f32.mrf.mxu0
  %v70 = vadd.f32 0.0, %v69
  %71 = vmatmul.f32.gmra.mxu0 %v17
  %v72 = vpop.f32.mrf.mxu0
  %v73 = vadd.f32 0.0, %v72
  %74 = vmatmul.f32.gmra.mxu0 %v18
  %v75 = vpop.f32.mrf.mxu0
  %v76 = vadd.f32 0.0, %v75
  %77 = vmatmul.f32.gmra.mxu0 %v19
  %v78 = vpop.f32.mrf.mxu0
  %v79 = vadd.f32 0.0, %v78
  %80 = vmatmul.f32.gmra.mxu0 %v20
  %v81 = vpop.f32.mrf.mxu0
  %v82 = vadd.f32 0.0, %v81
  %83 = vmatmul.f32.gmra.mxu0 %v21
  %v84 = vpop.f32.mrf.mxu0
  %v85 = vadd.f32 0.0, %v84
  %86 = vmatmul.f32.gmra.mxu0 %v22
  %v87 = vpop.f32.mrf.mxu0
  %v88 = vadd.f32 0.0, %v87
  %89 = vmatmul.f32.gmra.mxu0 %v23
  %v90 = vpop.f32.mrf.mxu0
  %v91 = vadd.f32 0.0, %v90
  %92 = vmatmul.f32.gmra.mxu0 %v24
  %v93 = vpop.f32.mrf.mxu0
  %v94 = vadd.f32 0.0, %v93
  %95 = vmatmul.f32.gmra.mxu0 %v25
  %v96 = vpop.f32.mrf.mxu0
  %v97 = vadd.f32 0.0, %v96
  %98 = vmatmul.f32.gmra.mxu0 %v26
  %v99 = vpop.f32.mrf.mxu0
  %v100 = vadd.f32 0.0, %v99
  %101 = vmatmul.f32.gmra.mxu0 %v27
  %v102 = vpop.f32.mrf.mxu0
  %v103 = vadd.f32 0.0, %v102
  %104 = vmatmul.f32.gmra.mxu0 %v28
  %v105 = vpop.f32.mrf.mxu0
  %v106 = vadd.f32 0.0, %v105
  %107 = vmatmul.f32.gmra.mxu0 %v29
  %v108 = vpop.f32.mrf.mxu0
  %v109 = vadd.f32 0.0, %v108
  %110 = vdwg.mxu0
  %v111 = vld [vmem:[%s2] sm:$0xff]
  %v112 = vld [vmem:[%s2 + $0x8] sm:$0xff]
  %v113 = vld [vmem:[%s2 + $0x10] sm:$0xff]
  %v114 = vld [vmem:[%s2 + $0x18] sm:$0xff]
  %v115 = vld [vmem:[%s2 + $0x20] sm:$0xff]
  %v116 = vld [vmem:[%s2 + $0x28] sm:$0xff]
  %v117 = vld [vmem:[%s2 + $0x30] sm:$0xff]
  %v118 = vld [vmem:[%s2 + $0x38] sm:$0xff]
  %v119 = vld [vmem:[%s2 + $0x40] sm:$0xff]
  %v120 = vld [vmem:[%s2 + $0x48] sm:$0xff]
  %v121 = vld [vmem:[%s2 + $0x50] sm:$0xff]
  %v122 = vld [vmem:[%s2 + $0x58] sm:$0xff]
  %v123 = vld [vmem:[%s2 + $0x60] sm:$0xff]
  %v124 = vld [vmem:[%s2 + $0x68] sm:$0xff]
  %v125 = vld [vmem:[%s2 + $0x70] sm:$0xff]
  %v126 = vld [vmem:[%s2 + $0x78] sm:$0xff]
  %128 = vset.pattern.permute.xlu0 0
  %129 = vperm.xlu0 %128, %v111
  %v130 = vpop.permute.xlu0 %129
  %133 = vset.pattern.permute.xlu0 0
  %134 = vperm.xlu0 %133, %v112
  %v135 = vpop.permute.xlu0 %134
  %138 = vset.pattern.permute.xlu0 0
  %139 = vperm.xlu0 %138, %v113
  %v140 = vpop.permute.xlu0 %139
  %143 = vset.pattern.permute.xlu0 0
  %144 = vperm.xlu0 %143, %v114
  %v145 = vpop.permute.xlu0 %144
  %148 = vset.pattern.permute.xlu0 0
  %149 = vperm.xlu0 %148, %v115
  %v150 = vpop.permute.xlu0 %149
  %153 = vset.pattern.permute.xlu0 0
  %154 = vperm.xlu0 %153, %v116
  %v155 = vpop.permute.xlu0 %154
  %158 = vset.pattern.permute.xlu0 0
  %159 = vperm.xlu0 %158, %v117
  %v160 = vpop.permute.xlu0 %159
  %163 = vset.pattern.permute.xlu0 0
  %164 = vperm.xlu0 %163, %v118
  %v165 = vpop.permute.xlu0 %164
  %168 = vset.pattern.permute.xlu0 0
  %169 = vperm.xlu0 %168, %v119
  %v170 = vpop.permute.xlu0 %169
  %173 = vset.pattern.permute.xlu0 0
  %174 = vperm.xlu0 %173, %v120
  %v175 = vpop.permute.xlu0 %174
  %178 = vset.pattern.permute.xlu0 0
  %179 = vperm.xlu0 %178, %v121
  %v180 = vpop.permute.xlu0 %179
  %183 = vset.pattern.permute.xlu0 0
  %184 = vperm.xlu0 %183, %v122
  %v185 = vpop.permute.xlu0 %184
  %188 = vset.pattern.permute.xlu0 0
  %189 = vperm.xlu0 %188, %v123
  %v190 = vpop.permute.xlu0 %189
  %193 = vset.pattern.permute.xlu0 0
  %194 = vperm.xlu0 %193, %v124
  %v195 = vpop.permute.xlu0 %194
  %198 = vset.pattern.permute.xlu0 0
  %199 = vperm.xlu0 %198, %v125
  %v200 = vpop.permute.xlu0 %199
  %203 = vset.pattern.permute.xlu0 0
  %204 = vperm.xlu0 %203, %v126
  %v205 = vpop.permute.xlu0 %204
  %v207 = vmul.f32 %v130, %v64
  %v208 = vmul.f32 %v135, %v67
  %v209 = vmul.f32 %v140, %v70
  %v210 = vmul.f32 %v145, %v73
  %v211 = vmul.f32 %v150, %v76
  %v212 = vmul.f32 %v155, %v79
  %v213 = vmul.f32 %v160, %v82
  %v214 = vmul.f32 %v165, %v85
  %v215 = vmul.f32 %v170, %v88
  %v216 = vmul.f32 %v175, %v91
  %v217 = vmul.f32 %v180, %v94
  %v218 = vmul.f32 %v185, %v97
  %v219 = vmul.f32 %v190, %v100
  %v220 = vmul.f32 %v195, %v103
  %v221 = vmul.f32 %v200, %v106
  %v222 = vmul.f32 %v205, %v109
  %v223 = vpack.c.bf16 %v207, %v207
  %v224 = vpack.c.bf16 %v208, %v208
  %v225 = vpack.c.bf16 %v209, %v209
  %v226 = vpack.c.bf16 %v210, %v210
  %v227 = vpack.c.bf16 %v211, %v211
  %v228 = vpack.c.bf16 %v212, %v212
  %v229 = vpack.c.bf16 %v213, %v213
  %v230 = vpack.c.bf16 %v214, %v214
  %v231 = vpack.c.bf16 %v215, %v215
  %v232 = vpack.c.bf16 %v216, %v216
  %v233 = vpack.c.bf16 %v217, %v217
  %v234 = vpack.c.bf16 %v218, %v218
  %v235 = vpack.c.bf16 %v219, %v219
  %v236 = vpack.c.bf16 %v220, %v220
  %v237 = vpack.c.bf16 %v221, %v221
  %v238 = vpack.c.bf16 %v222, %v222
  %239 = vst [vmem:[%s3] sm:$0xf] %v223
  %240 = vst [vmem:[%s3 + $0x4] sm:$0xf] %v224
  %241 = vst [vmem:[%s3 + $0x8] sm:$0xf] %v225
  %242 = vst [vmem:[%s3 + $0xc] sm:$0xf] %v226
  %243 = vst [vmem:[%s3 + $0x10] sm:$0xf] %v227
  %244 = vst [vmem:[%s3 + $0x14] sm:$0xf] %v228
  %245 = vst [vmem:[%s3 + $0x18] sm:$0xf] %v229
  %246 = vst [vmem:[%s3 + $0x1c] sm:$0xf] %v230
  %247 = vst [vmem:[%s3 + $0x20] sm:$0xf] %v231
  %248 = vst [vmem:[%s3 + $0x24] sm:$0xf] %v232
  %249 = vst [vmem:[%s3 + $0x28] sm:$0xf] %v233
  %250 = vst [vmem:[%s3 + $0x2c] sm:$0xf] %v234
  %251 = vst [vmem:[%s3 + $0x30] sm:$0xf] %v235
  %252 = vst [vmem:[%s3 + $0x34] sm:$0xf] %v236
  %253 = vst [vmem:[%s3 + $0x38] sm:$0xf] %v237
  %254 = vst [vmem:[%s3 + $0x3c] sm:$0xf] %v238
  // Predicated region
  $region14: #{gcn_forward.2} parent=0 // pred_check
    _
  $region15: #{gcn_forward.2} parent=0 // pred_check_branch
    %256 = sbr.rel (0) target = $region17
  $region16: #{gcn_forward.2} parent=0 // pred_region
    _
  $region17: #{gcn_forward.2} parent=0 // pred_fallthru
    _
  // Predicated region
  $region18: #{gcn_forward.2} parent=0 // pred_check
    _
  $region19: #{gcn_forward.2} parent=0 // pred_check_branch
    %258 = sbr.rel (0) target = $region21
  $region20: #{gcn_forward.2} parent=0 // pred_region
    _
  $region21: #{gcn_forward.2} parent=0 // pred_fallthru
    _

// kernel: gcn_forward.3
$region0: #{gcn_forward.3}
  #allocation0 [shape = 'u32[]', space=smem, size = 0x4, offset = 0x4, fixed_abs, tag = 'smem constant byte address 0x4 - core index']
  #allocation1 [shape = 'u32[72,128]{1,0:T(1,128)}', space=vmem, size = 0x9000, scoped, tag = 'internal scratch']
  %s0 = inlined_call_operand.vmem [shape: bf16[128,128], index: 0, kind: input, shape index: {}]
  %s1 = inlined_call_operand.vmem [shape: bf16[128,128], index: 1, kind: input, shape index: {}, may-alias: {1,2}]
  %s2 = inlined_call_operand.vmem [shape: bf16[128,128], index: 2, kind: input, shape index: {}, may-alias: {1,2}]
  %s3 = inlined_call_operand.vmem [shape: f32[128,1], index: 3, kind: input, shape index: {}]
  %s4 = inlined_call_operand.vmem [shape: f32[1,128], index: 4, kind: input, shape index: {}]
  %s5 = inlined_call_operand.vmem [shape: f32[128,128], index: 5, kind: output, shape index: {}]
  %s6 = sld [smem:[#allocation0]]
  $region38: #{gcn_forward.3} parent=0
    _
  %s8 = ssub.s32 1, %s6
  %s9 = scalar_select 0, %s8, %s6
  // Predicated region
  $region2: #{gcn_forward.3} parent=0 // pred_check
    _
  $region3: #{gcn_forward.3} parent=0 // pred_check_branch
    %11 = sbr.rel (0) target = $region5
  $region4: #{gcn_forward.3} parent=0 // pred_region
    _
  $region5: #{gcn_forward.3} parent=0 // pred_fallthru
    _
  // Predicated region
  $region6: #{gcn_forward.3} parent=0 // pred_check
    _
  $region7: #{gcn_forward.3} parent=0 // pred_check_branch
    %13 = sbr.rel (0) target = $region9
  $region8: #{gcn_forward.3} parent=0 // pred_region
    _
  $region9: #{gcn_forward.3} parent=0 // pred_fallthru
    _
  // Predicated region
  $region10: #{gcn_forward.3} parent=0 // pred_check
    _
  $region11: #{gcn_forward.3} parent=0 // pred_check_branch
    %15 = sbr.rel (0) target = $region13
  $region12: #{gcn_forward.3} parent=0 // pred_region
    _
  $region13: #{gcn_forward.3} parent=0 // pred_fallthru
    _
  // Predicated region
  $region14: #{gcn_forward.3} parent=0 // pred_check
    _
  $region15: #{gcn_forward.3} parent=0 // pred_check_branch
    %17 = sbr.rel (0) target = $region17
  $region16: #{gcn_forward.3} parent=0 // pred_region
    _
  $region17: #{gcn_forward.3} parent=0 // pred_fallthru
    _
  // Predicated region
  $region18: #{gcn_forward.3} parent=0 // pred_check
    _
  $region19: #{gcn_forward.3} parent=0 // pred_check_branch
    %19 = sbr.rel (0) target = $region21
  $region20: #{gcn_forward.3} parent=0 // pred_region
    _
  $region21: #{gcn_forward.3} parent=0 // pred_fallthru
    _
  %p20 = scmp.eq.s32.totalorder 0, 0
  // Predicated region
  $region22: #{gcn_forward.3} parent=0 // pred_check
    %p21 = pneg %p20
  $region23: #{gcn_forward.3} parent=0 // pred_check_branch
    %23 = sbr.rel (%p21) target = $region25
  $region24: #{gcn_forward.3} parent=0 // pred_region
    %24 = vst [vmem:[%s5] sm:$0xff] 0.0
    %25 = vst [vmem:[%s5 + $0x8] sm:$0xff] 0.0
    %26 = vst [vmem:[%s5 + $0x10] sm:$0xff] 0.0
    %27 = vst [vmem:[%s5 + $0x18] sm:$0xff] 0.0
    %28 = vst [vmem:[%s5 + $0x20] sm:$0xff] 0.0
    %29 = vst [vmem:[%s5 + $0x28] sm:$0xff] 0.0
    %30 = vst [vmem:[%s5 + $0x30] sm:$0xff] 0.0
    %31 = vst [vmem:[%s5 + $0x38] sm:$0xff] 0.0
    %32 = vst [vmem:[%s5 + $0x40] sm:$0xff] 0.0
    %33 = vst [vmem:[%s5 + $0x48] sm:$0xff] 0.0
    %34 = vst [vmem:[%s5 + $0x50] sm:$0xff] 0.0
    %35 = vst [vmem:[%s5 + $0x58] sm:$0xff] 0.0
    %36 = vst [vmem:[%s5 + $0x60] sm:$0xff] 0.0
    %37 = vst [vmem:[%s5 + $0x68] sm:$0xff] 0.0
    %38 = vst [vmem:[%s5 + $0x70] sm:$0xff] 0.0
    %39 = vst [vmem:[%s5 + $0x78] sm:$0xff] 0.0
  $region25: #{gcn_forward.3} parent=0 // pred_fallthru
    _
  %s40 = smul.u32 0, 128
  %s41 = sshra.s32 %s40, 3
  %s42 = sand.u32 %s40, 7
  %s43 = smul.addr %s41, 4
  %s44 = scalar_lea.vmem %s1, %s43
  %v45 = vld [vmem:[%s44] sm:$0xf]
  %v46 = vld [vmem:[%s44 + $0x4] sm:$0xf]
  %v47 = vld [vmem:[%s44 + $0x8] sm:$0xf]
  %v48 = vld [vmem:[%s44 + $0xc] sm:$0xf]
  %v49 = vld [vmem:[%s44 + $0x10] sm:$0xf]
  %v50 = vld [vmem:[%s44 + $0x14] sm:$0xf]
  %v51 = vld [vmem:[%s44 + $0x18] sm:$0xf]
  %v52 = vld [vmem:[%s44 + $0x1c] sm:$0xf]
  %v53 = vld [vmem:[%s44 + $0x20] sm:$0xf]
  %v54 = vld [vmem:[%s44 + $0x24] sm:$0xf]
  %v55 = vld [vmem:[%s44 + $0x28] sm:$0xf]
  %v56 = vld [vmem:[%s44 + $0x2c] sm:$0xf]
  %v57 = vld [vmem:[%s44 + $0x30] sm:$0xf]
  %v58 = vld [vmem:[%s44 + $0x34] sm:$0xf]
  %v59 = vld [vmem:[%s44 + $0x38] sm:$0xf]
  %v60 = vld [vmem:[%s44 + $0x3c] sm:$0xf]
  %v61 = vld [vmem:[%s5] sm:$0xff]
  %v62 = vld [vmem:[%s5 + $0x8] sm:$0xff]
  %v63 = vld [vmem:[%s5 + $0x10] sm:$0xff]
  %v64 = vld [vmem:[%s5 + $0x18] sm:$0xff]
  %v65 = vld [vmem:[%s5 + $0x20] sm:$0xff]
  %v66 = vld [vmem:[%s5 + $0x28] sm:$0xff]
  %v67 = vld [vmem:[%s5 + $0x30] sm:$0xff]
  %v68 = vld [vmem:[%s5 + $0x38] sm:$0xff]
  %v69 = vld [vmem:[%s5 + $0x40] sm:$0xff]
  %v70 = vld [vmem:[%s5 + $0x48] sm:$0xff]
  %v71 = vld [vmem:[%s5 + $0x50] sm:$0xff]
  %v72 = vld [vmem:[%s5 + $0x58] sm:$0xff]
  %v73 = vld [vmem:[%s5 + $0x60] sm:$0xff]
  %v74 = vld [vmem:[%s5 + $0x68] sm:$0xff]
  %v75 = vld [vmem:[%s5 + $0x70] sm:$0xff]
  %v76 = vld [vmem:[%s5 + $0x78] sm:$0xff]
  %v77 = vld [vmem:[%s0] sm:$0xf]
  %v78 = vld [vmem:[%s0 + $0x4] sm:$0xf]
  %v79 = vld [vmem:[%s0 + $0x8] sm:$0xf]
  %v80 = vld [vmem:[%s0 + $0xc] sm:$0xf]
  %v81 = vld [vmem:[%s0 + $0x10] sm:$0xf]
  %v82 = vld [vmem:[%s0 + $0x14] sm:$0xf]
  %v83 = vld [vmem:[%s0 + $0x18] sm:$0xf]
  %v84 = vld [vmem:[%s0 + $0x1c] sm:$0xf]
  %v85 = vld [vmem:[%s0 + $0x20] sm:$0xf]
  %v86 = vld [vmem:[%s0 + $0x24] sm:$0xf]
  %v87 = vld [vmem:[%s0 + $0x28] sm:$0xf]
  %v88 = vld [vmem:[%s0 + $0x2c] sm:$0xf]
  %v89 = vld [vmem:[%s0 + $0x30] sm:$0xf]
  %v90 = vld [vmem:[%s0 + $0x34] sm:$0xf]
  %v91 = vld [vmem:[%s0 + $0x38] sm:$0xf]
  %v92 = vld [vmem:[%s0 + $0x3c] sm:$0xf]
  %v109 = vunpack.c.l.b16 %v77
  %v110 = vunpack.c.l.b16 %v78
  %v111 = vunpack.c.l.b16 %v79
  %v112 = vunpack.c.l.b16 %v80
  %v113 = vunpack.c.l.b16 %v81
  %v114 = vunpack.c.l.b16 %v82
  %v115 = vunpack.c.l.b16 %v83
  %v116 = vunpack.c.l.b16 %v84
  %v117 = vunpack.c.l.b16 %v85
  %v118 = vunpack.c.l.b16 %v86
  %v119 = vunpack.c.l.b16 %v87
  %v120 = vunpack.c.l.b16 %v88
  %v121 = vunpack.c.l.b16 %v89
  %v122 = vunpack.c.l.b16 %v90
  %v123 = vunpack.c.l.b16 %v91
  %v124 = vunpack.c.l.b16 %v92
  %v125 = vpack.c.b16 %v110, %v109
  %v126 = vpack.c.b16 %v112, %v111
  %v127 = vpack.c.b16 %v114, %v113
  %v128 = vpack.c.b16 %v116, %v115
  %v129 = vpack.c.b16 %v118, %v117
  %v130 = vpack.c.b16 %v120, %v119
  %v131 = vpack.c.b16 %v122, %v121
  %v132 = vpack.c.b16 %v124, %v123
  %v157 = vunpack.c.l.b16 %v45
  %v158 = vunpack.c.l.b16 %v46
  %v159 = vunpack.c.l.b16 %v47
  %v160 = vunpack.c.l.b16 %v48
  %v161 = vunpack.c.l.b16 %v49
  %v162 = vunpack.c.l.b16 %v50
  %v163 = vunpack.c.l.b16 %v51
  %v164 = vunpack.c.l.b16 %v52
  %v165 = vunpack.c.l.b16 %v53
  %v166 = vunpack.c.l.b16 %v54
  %v167 = vunpack.c.l.b16 %v55
  %v168 = vunpack.c.l.b16 %v56
  %v169 = vunpack.c.l.b16 %v57
  %v170 = vunpack.c.l.b16 %v58
  %v171 = vunpack.c.l.b16 %v59
  %v172 = vunpack.c.l.b16 %v60
  %v173 = vpack.c.b16 %v158, %v157
  %v174 = vpack.c.b16 %v160, %v159
  %v175 = vpack.c.b16 %v162, %v161
  %v176 = vpack.c.b16 %v164, %v163
  %v177 = vpack.c.b16 %v166, %v165
  %v178 = vpack.c.b16 %v168, %v167
  %v179 = vpack.c.b16 %v170, %v169
  %v180 = vpack.c.b16 %v172, %v171
  %189 = vmatpush.bf16.msra.mxu0 %v180
  %190 = vmatpush.bf16.msra.mxu0 %v179
  %191 = vmatpush.bf16.msra.mxu0 %v178
  %192 = vmatpush.bf16.msra.mxu0 %v177
  %193 = vmatpush.bf16.msra.mxu0 %v176
  %194 = vmatpush.bf16.msra.mxu0 %v175
  %195 = vmatpush.bf16.msra.mxu0 %v174
  %196 = vmatpush.bf16.msra.mxu0 %v173
  %197 = vmatmul.bf16.gmra.mxu0 %v125
  %v198 = vpop.f32.mrf.mxu0
  %v199 = vadd.f32 0.0, %v198
  %v200 = vpop.f32.mrf.mxu0
  %v201 = vadd.f32 0.0, %v200
  %202 = vmatmul.bf16.gmra.mxu0 %v126
  %v203 = vpop.f32.mrf.mxu0
  %v204 = vadd.f32 0.0, %v203
  %v205 = vpop.f32.mrf.mxu0
  %v206 = vadd.f32 0.0, %v205
  %207 = vmatmul.bf16.gmra.mxu0 %v127
  %v208 = vpop.f32.mrf.mxu0
  %v209 = vadd.f32 0.0, %v208
  %v210 = vpop.f32.mrf.mxu0
  %v211 = vadd.f32 0.0, %v210
  %212 = vmatmul.bf16.gmra.mxu0 %v128
  %v213 = vpop.f32.mrf.mxu0
  %v214 = vadd.f32 0.0, %v213
  %v215 = vpop.f32.mrf.mxu0
  %v216 = vadd.f32 0.0, %v215
  %217 = vmatmul.bf16.gmra.mxu0 %v129
  %v218 = vpop.f32.mrf.mxu0
  %v219 = vadd.f32 0.0, %v218
  %v220 = vpop.f32.mrf.mxu0
  %v221 = vadd.f32 0.0, %v220
  %222 = vmatmul.bf16.gmra.mxu0 %v130
  %v223 = vpop.f32.mrf.mxu0
  %v224 = vadd.f32 0.0, %v223
  %v225 = vpop.f32.mrf.mxu0
  %v226 = vadd.f32 0.0, %v225
  %227 = vmatmul.bf16.gmra.mxu0 %v131
  %v228 = vpop.f32.mrf.mxu0
  %v229 = vadd.f32 0.0, %v228
  %v230 = vpop.f32.mrf.mxu0
  %v231 = vadd.f32 0.0, %v230
  %232 = vmatmul.bf16.gmra.mxu0 %v132
  %v233 = vpop.f32.mrf.mxu0
  %v234 = vadd.f32 0.0, %v233
  %v235 = vpop.f32.mrf.mxu0
  %v236 = vadd.f32 0.0, %v235
  %237 = vdwg.mxu0
  %v238 = vadd.f32 %v61, %v199
  %v239 = vadd.f32 %v62, %v201
  %v240 = vadd.f32 %v63, %v204
  %v241 = vadd.f32 %v64, %v206
  %v242 = vadd.f32 %v65, %v209
  %v243 = vadd.f32 %v66, %v211
  %v244 = vadd.f32 %v67, %v214
  %v245 = vadd.f32 %v68, %v216
  %v246 = vadd.f32 %v69, %v219
  %v247 = vadd.f32 %v70, %v221
  %v248 = vadd.f32 %v71, %v224
  %v249 = vadd.f32 %v72, %v226
  %v250 = vadd.f32 %v73, %v229
  %v251 = vadd.f32 %v74, %v231
  %v252 = vadd.f32 %v75, %v234
  %v253 = vadd.f32 %v76, %v236
  %254 = vst [vmem:[%s5] sm:$0xff] %v238
  %255 = vst [vmem:[%s5 + $0x8] sm:$0xff] %v239
  %256 = vst [vmem:[%s5 + $0x10] sm:$0xff] %v240
  %257 = vst [vmem:[%s5 + $0x18] sm:$0xff] %v241
  %258 = vst [vmem:[%s5 + $0x20] sm:$0xff] %v242
  %259 = vst [vmem:[%s5 + $0x28] sm:$0xff] %v243
  %260 = vst [vmem:[%s5 + $0x30] sm:$0xff] %v244
  %261 = vst [vmem:[%s5 + $0x38] sm:$0xff] %v245
  %262 = vst [vmem:[%s5 + $0x40] sm:$0xff] %v246
  %263 = vst [vmem:[%s5 + $0x48] sm:$0xff] %v247
  %264 = vst [vmem:[%s5 + $0x50] sm:$0xff] %v248
  %265 = vst [vmem:[%s5 + $0x58] sm:$0xff] %v249
  %266 = vst [vmem:[%s5 + $0x60] sm:$0xff] %v250
  %267 = vst [vmem:[%s5 + $0x68] sm:$0xff] %v251
  %268 = vst [vmem:[%s5 + $0x70] sm:$0xff] %v252
  %269 = vst [vmem:[%s5 + $0x78] sm:$0xff] %v253
  // Predicated region
  $region26: #{gcn_forward.3} parent=0 // pred_check
    %p270 = pneg %p20
  $region27: #{gcn_forward.3} parent=0 // pred_check_branch
    %272 = sbr.rel (%p270) target = $region29
  $region28: #{gcn_forward.3} parent=0 // pred_region
    %v273 = vld [vmem:[%s5] sm:$0xff]
    %v274 = vld [vmem:[%s5 + $0x8] sm:$0xff]
    %v275 = vld [vmem:[%s5 + $0x10] sm:$0xff]
    %v276 = vld [vmem:[%s5 + $0x18] sm:$0xff]
    %v277 = vld [vmem:[%s5 + $0x20] sm:$0xff]
    %v278 = vld [vmem:[%s5 + $0x28] sm:$0xff]
    %v279 = vld [vmem:[%s5 + $0x30] sm:$0xff]
    %v280 = vld [vmem:[%s5 + $0x38] sm:$0xff]
    %v281 = vld [vmem:[%s5 + $0x40] sm:$0xff]
    %v282 = vld [vmem:[%s5 + $0x48] sm:$0xff]
    %v283 = vld [vmem:[%s5 + $0x50] sm:$0xff]
    %v284 = vld [vmem:[%s5 + $0x58] sm:$0xff]
    %v285 = vld [vmem:[%s5 + $0x60] sm:$0xff]
    %v286 = vld [vmem:[%s5 + $0x68] sm:$0xff]
    %v287 = vld [vmem:[%s5 + $0x70] sm:$0xff]
    %v288 = vld [vmem:[%s5 + $0x78] sm:$0xff]
    %v289 = vld [vmem:[%s2] sm:$0xf]
    %v290 = vld [vmem:[%s2 + $0x4] sm:$0xf]
    %v291 = vld [vmem:[%s2 + $0x8] sm:$0xf]
    %v292 = vld [vmem:[%s2 + $0xc] sm:$0xf]
    %v293 = vld [vmem:[%s2 + $0x10] sm:$0xf]
    %v294 = vld [vmem:[%s2 + $0x14] sm:$0xf]
    %v295 = vld [vmem:[%s2 + $0x18] sm:$0xf]
    %v296 = vld [vmem:[%s2 + $0x1c] sm:$0xf]
    %v297 = vld [vmem:[%s2 + $0x20] sm:$0xf]
    %v298 = vld [vmem:[%s2 + $0x24] sm:$0xf]
    %v299 = vld [vmem:[%s2 + $0x28] sm:$0xf]
    %v300 = vld [vmem:[%s2 + $0x2c] sm:$0xf]
    %v301 = vld [vmem:[%s2 + $0x30] sm:$0xf]
    %v302 = vld [vmem:[%s2 + $0x34] sm:$0xf]
    %v303 = vld [vmem:[%s2 + $0x38] sm:$0xf]
    %v304 = vld [vmem:[%s2 + $0x3c] sm:$0xf]
    %v305 = vunpack.c.l.bf16 %v289
    %v306 = vunpack.c.l.bf16 %v290
    %v307 = vunpack.c.l.bf16 %v291
    %v308 = vunpack.c.l.bf16 %v292
    %v309 = vunpack.c.l.bf16 %v293
    %v310 = vunpack.c.l.bf16 %v294
    %v311 = vunpack.c.l.bf16 %v295
    %v312 = vunpack.c.l.bf16 %v296
    %v313 = vunpack.c.l.bf16 %v297
    %v314 = vunpack.c.l.bf16 %v298
    %v315 = vunpack.c.l.bf16 %v299
    %v316 = vunpack.c.l.bf16 %v300
    %v317 = vunpack.c.l.bf16 %v301
    %v318 = vunpack.c.l.bf16 %v302
    %v319 = vunpack.c.l.bf16 %v303
    %v320 = vunpack.c.l.bf16 %v304
    %v321 = vadd.f32 %v273, %v305
    %v322 = vadd.f32 %v274, %v306
    %v323 = vadd.f32 %v275, %v307
    %v324 = vadd.f32 %v276, %v308
    %v325 = vadd.f32 %v277, %v309
    %v326 = vadd.f32 %v278, %v310
    %v327 = vadd.f32 %v279, %v311
    %v328 = vadd.f32 %v280, %v312
    %v329 = vadd.f32 %v281, %v313
    %v330 = vadd.f32 %v282, %v314
    %v331 = vadd.f32 %v283, %v315
    %v332 = vadd.f32 %v284, %v316
    %v333 = vadd.f32 %v285, %v317
    %v334 = vadd.f32 %v286, %v318
    %v335 = vadd.f32 %v287, %v319
    %v336 = vadd.f32 %v288, %v320
    %v337 = vld [vmem:[%s3] sm:$0xff]
    %v338 = vld [vmem:[%s3 + $0x8] sm:$0xff]
    %v339 = vld [vmem:[%s3 + $0x10] sm:$0xff]
    %v340 = vld [vmem:[%s3 + $0x18] sm:$0xff]
    %v341 = vld [vmem:[%s3 + $0x20] sm:$0xff]
    %v342 = vld [vmem:[%s3 + $0x28] sm:$0xff]
    %v343 = vld [vmem:[%s3 + $0x30] sm:$0xff]
    %v344 = vld [vmem:[%s3 + $0x38] sm:$0xff]
    %v345 = vld [vmem:[%s3 + $0x40] sm:$0xff]
    %v346 = vld [vmem:[%s3 + $0x48] sm:$0xff]
    %v347 = vld [vmem:[%s3 + $0x50] sm:$0xff]
    %v348 = vld [vmem:[%s3 + $0x58] sm:$0xff]
    %v349 = vld [vmem:[%s3 + $0x60] sm:$0xff]
    %v350 = vld [vmem:[%s3 + $0x68] sm:$0xff]
    %v351 = vld [vmem:[%s3 + $0x70] sm:$0xff]
    %v352 = vld [vmem:[%s3 + $0x78] sm:$0xff]
    %354 = vset.pattern.permute.xlu0 0
    %355 = vperm.xlu0 %354, %v337
    %v356 = vpop.permute.xlu0 %355
    %359 = vset.pattern.permute.xlu0 0
    %360 = vperm.xlu0 %359, %v338
    %v361 = vpop.permute.xlu0 %360
    %364 = vset.pattern.permute.xlu0 0
    %365 = vperm.xlu0 %364, %v339
    %v366 = vpop.permute.xlu0 %365
    %369 = vset.pattern.permute.xlu0 0
    %370 = vperm.xlu0 %369, %v340
    %v371 = vpop.permute.xlu0 %370
    %374 = vset.pattern.permute.xlu0 0
    %375 = vperm.xlu0 %374, %v341
    %v376 = vpop.permute.xlu0 %375
    %379 = vset.pattern.permute.xlu0 0
    %380 = vperm.xlu0 %379, %v342
    %v381 = vpop.permute.xlu0 %380
    %384 = vset.pattern.permute.xlu0 0
    %385 = vperm.xlu0 %384, %v343
    %v386 = vpop.permute.xlu0 %385
    %389 = vset.pattern.permute.xlu0 0
    %390 = vperm.xlu0 %389, %v344
    %v391 = vpop.permute.xlu0 %390
    %394 = vset.pattern.permute.xlu0 0
    %395 = vperm.xlu0 %394, %v345
    %v396 = vpop.permute.xlu0 %395
    %399 = vset.pattern.permute.xlu0 0
    %400 = vperm.xlu0 %399, %v346
    %v401 = vpop.permute.xlu0 %400
    %404 = vset.pattern.permute.xlu0 0
    %405 = vperm.xlu0 %404, %v347
    %v406 = vpop.permute.xlu0 %405
    %409 = vset.pattern.permute.xlu0 0
    %410 = vperm.xlu0 %409, %v348
    %v411 = vpop.permute.xlu0 %410
    %414 = vset.pattern.permute.xlu0 0
    %415 = vperm.xlu0 %414, %v349
    %v416 = vpop.permute.xlu0 %415
    %419 = vset.pattern.permute.xlu0 0
    %420 = vperm.xlu0 %419, %v350
    %v421 = vpop.permute.xlu0 %420
    %424 = vset.pattern.permute.xlu0 0
    %425 = vperm.xlu0 %424, %v351
    %v426 = vpop.permute.xlu0 %425
    %429 = vset.pattern.permute.xlu0 0
    %430 = vperm.xlu0 %429, %v352
    %v431 = vpop.permute.xlu0 %430
    %v433 = vmul.f32 %v356, %v321
    %v434 = vmul.f32 %v361, %v322
    %v435 = vmul.f32 %v366, %v323
    %v436 = vmul.f32 %v371, %v324
    %v437 = vmul.f32 %v376, %v325
    %v438 = vmul.f32 %v381, %v326
    %v439 = vmul.f32 %v386, %v327
    %v440 = vmul.f32 %v391, %v328
    %v441 = vmul.f32 %v396, %v329
    %v442 = vmul.f32 %v401, %v330
    %v443 = vmul.f32 %v406, %v331
    %v444 = vmul.f32 %v411, %v332
    %v445 = vmul.f32 %v416, %v333
    %v446 = vmul.f32 %v421, %v334
    %v447 = vmul.f32 %v426, %v335
    %v448 = vmul.f32 %v431, %v336
    %v449 = vld [vmem:[%s4] sm:$0x1]
    %v451 = vperm.slane %v449, 0
    %v453 = vadd.f32 %v433, %v451
    %v454 = vadd.f32 %v434, %v451
    %v455 = vadd.f32 %v435, %v451
    %v456 = vadd.f32 %v436, %v451
    %v457 = vadd.f32 %v437, %v451
    %v458 = vadd.f32 %v438, %v451
    %v459 = vadd.f32 %v439, %v451
    %v460 = vadd.f32 %v440, %v451
    %v461 = vadd.f32 %v441, %v451
    %v462 = vadd.f32 %v442, %v451
    %v463 = vadd.f32 %v443, %v451
    %v464 = vadd.f32 %v444, %v451
    %v465 = vadd.f32 %v445, %v451
    %v466 = vadd.f32 %v446, %v451
    %v467 = vadd.f32 %v447, %v451
    %v468 = vadd.f32 %v448, %v451
    %469 = vst [vmem:[%s5] sm:$0xff] %v453
    %470 = vst [vmem:[%s5 + $0x8] sm:$0xff] %v454
    %471 = vst [vmem:[%s5 + $0x10] sm:$0xff] %v455
    %472 = vst [vmem:[%s5 + $0x18] sm:$0xff] %v456
    %473 = vst [vmem:[%s5 + $0x20] sm:$0xff] %v457
    %474 = vst [vmem:[%s5 + $0x28] sm:$0xff] %v458
    %475 = vst [vmem:[%s5 + $0x30] sm:$0xff] %v459
    %476 = vst [vmem:[%s5 + $0x38] sm:$0xff] %v460
    %477 = vst [vmem:[%s5 + $0x40] sm:$0xff] %v461
    %478 = vst [vmem:[%s5 + $0x48] sm:$0xff] %v462
    %479 = vst [vmem:[%s5 + $0x50] sm:$0xff] %v463
    %480 = vst [vmem:[%s5 + $0x58] sm:$0xff] %v464
    %481 = vst [vmem:[%s5 + $0x60] sm:$0xff] %v465
    %482 = vst [vmem:[%s5 + $0x68] sm:$0xff] %v466
    %483 = vst [vmem:[%s5 + $0x70] sm:$0xff] %v467
    %484 = vst [vmem:[%s5 + $0x78] sm:$0xff] %v468
  $region29: #{gcn_forward.3} parent=0 // pred_fallthru
    _
  // Predicated region
  $region30: #{gcn_forward.3} parent=0 // pred_check
    _
  $region31: #{gcn_forward.3} parent=0 // pred_check_branch
    %486 = sbr.rel (0) target = $region33
  $region32: #{gcn_forward.3} parent=0 // pred_region
    _
  $region33: #{gcn_forward.3} parent=0 // pred_fallthru
    _
  // Predicated region
  $region34: #{gcn_forward.3} parent=0 // pred_check
    _
  $region35: #{gcn_forward.3} parent=0 // pred_check_branch
    %488 = sbr.rel (0) target = $region37
  $region36: #{gcn_forward.3} parent=0 // pred_region
    _
  $region37: #{gcn_forward.3} parent=0 // pred_fallthru
    _

</llo_original>
